<compile_context>
chip_gen: v6e
topology: v6e:2x2x1
jax: 0.10.0
libtpu: 0.0.40
codegen_flags: <defaults>
</compile_context>

<pallas_src>
import functools
import math

import jax
import jax.numpy as jnp
from jax.experimental import pallas as pl
from jax.experimental.pallas import tpu as pltpu

NUM_INPUTS = 784          # 1 * 28 * 28
NUM_H1 = 256
NUM_H2 = 256
NUM_OUT = 10

_LANE = 128
N_PAD = ((NUM_OUT + _LANE - 1) // _LANE) * _LANE      # 128 (do NOT pad further)


def _round_up(n, m):
    return ((n + m - 1) // m) * m


def _compiler_params(num_parallel_axes):
    # Only attach Mosaic/TPU params when actually lowering for TPU.
    if jax.default_backend() != "tpu":
        return None
    return pltpu.CompilerParams(
        dimension_semantics=("parallel",) * num_parallel_axes,
    )


def _pick_batch_tile(B, batch_tile):
    """Full-dim block for tiny batches; otherwise a multiple-of-8 tile that
    yields >= 2 grid steps (feeds both v7x TensorCores)."""
    if B < 16:
        return B                                   # equals full dim -> legal
    return min(batch_tile, _round_up(pl.cdiv(B, 2), 8))


# ----------------------------------------------------------------------------
# FlattenLayer (the spec module): x.view(x.shape[0], -1)
# ----------------------------------------------------------------------------
def _flatten_copy_kernel(x_ref, o_ref):
    o_ref[...] = x_ref[...]


def flatten_layer(x, *, batch_tile=256, d_tile=2048):
    """Pallas FlattenLayer.forward.

    The reshape itself is metadata-only (identical to torch .view(B, -1)); the
    kernel is a batch- and feature-tiled identity copy with masked trailing
    blocks (no host-side padding, no extra HBM pass for a pad).
    """
    B = x.shape[0]
    D = math.prod(x.shape[1:])
    x2d = x.reshape(B, D)                 # metadata-only, == torch .view(B, -1)

    TB = _pick_batch_tile(B, batch_tile)
    # Lane-dense feature tiling; full-dim block when D is small.  Buffers:
    # 2 (in+out) x 2 (double-buffer) x TB x TD x 4 B <= ~8 MiB at defaults.
    TD = d_tile if D > d_tile else D

    grid = (pl.cdiv(B, TB), pl.cdiv(D, TD))
    out = pl.pallas_call(
        _flatten_copy_kernel,
        grid=grid,
        in_specs=[pl.BlockSpec((TB, TD), lambda i, j: (i, j))],
        out_specs=pl.BlockSpec((TB, TD), lambda i, j: (i, j)),
        out_shape=jax.ShapeDtypeStruct((B, D), x.dtype),
        compiler_params=_compiler_params(2),
    )(x2d)
    return out


# ----------------------------------------------------------------------------
# Fused MLP forward (FlattenLayer + 3 Linear layers + ReLU + dropout)
# ----------------------------------------------------------------------------
def _mlp_kernel(*refs, keep, dropout_mode, seed):
    if dropout_mode == "mask":
        (x_ref, w1_ref, b1_ref, w2_ref, b2_ref, w3_ref, b3_ref,
         m1_ref, m2_ref, o_ref) = refs
    else:
        (x_ref, w1_ref, b1_ref, w2_ref, b2_ref, w3_ref, b3_ref, o_ref) = refs
        m1_ref = m2_ref = None

    if dropout_mode == "rng":
        # Per-tile PRNG stream: fold the batch-grid index into the seed.
        pltpu.prng_seed(jnp.int32(seed) + pl.program_id(0))

    inv_keep = (1.0 / keep) if keep > 0.0 else 0.0

    def hidden_dropout(h):
        # Inverted dropout on hidden activations only (as in the reference Net).
        if dropout_mode == "none":
            return h
        if dropout_mode == "drop_all":
            return jnp.zeros_like(h)
        if dropout_mode == "rng":
            bits = pltpu.bitcast(pltpu.prng_random_bits(h.shape), jnp.int32)
            u = (jnp.bitwise_and(bits, 0x00FFFFFF).astype(jnp.float32)
                 * (1.0 / (1 << 24)))                       # uniform [0, 1)
            return jnp.where(u < keep, h * inv_keep, 0.0)
        # "mask": host-generated uint8 keep-masks (non-TPU / interpret fallback)
        m_ref = m1_ref if h.shape[1] == NUM_H1 else m2_ref
        return jnp.where(m_ref[...] != 0, h * inv_keep, 0.0)

    # Unpadded f32 input tile; cast to bf16 in-register (free under MXU slack).
    x = x_ref[...].astype(jnp.bfloat16)                        # (TB, 784)

    h1 = jnp.dot(x, w1_ref[...],
                 preferred_element_type=jnp.float32) + b1_ref[...]
    h1 = jnp.maximum(h1, 0.0)
    h1 = hidden_dropout(h1).astype(jnp.bfloat16)               # (TB, 256)

    h2 = jnp.dot(h1, w2_ref[...],
                 preferred_element_type=jnp.float32) + b2_ref[...]
    h2 = jnp.maximum(h2, 0.0)
    h2 = hidden_dropout(h2).astype(jnp.bfloat16)               # (TB, 256)

    # Lane-dense (TB, 128) output slab; columns 10..127 come from zero padding.
    o_ref[...] = jnp.dot(h2, w3_ref[...],
                         preferred_element_type=jnp.float32) + b3_ref[...]


def prepare_params(params):
    """One-time prep: transpose to (in, out), lane-pad the 10-wide output layer
    to 128, cast weights to bf16 (f32 MXU accumulation in-kernel)."""
    W1, b1, W2, b2, W3, b3 = params
    W1p = W1.T.astype(jnp.bfloat16)                            # (784, 256)
    W2p = W2.T.astype(jnp.bfloat16)                            # (256, 256)
    W3p = jnp.pad(W3.T, ((0, 0), (0, N_PAD - NUM_OUT))).astype(jnp.bfloat16)
    b1p = b1.reshape(1, NUM_H1).astype(jnp.float32)
    b2p = b2.reshape(1, NUM_H2).astype(jnp.float32)
    b3p = jnp.pad(b3, (0, N_PAD - NUM_OUT)).reshape(1, N_PAD).astype(jnp.float32)
    return (W1p, b1p, W2p, b2p, W3p, b3p)


def net_forward(x, prepared, *, dropout=0.0, is_train=False, seed=0,
                batch_tile=512):
    """Forward pass. x: (B, 1, 28, 28) or (B, 784) float32 -> (B, 10) float32."""
    W1p, b1p, W2p, b2p, W3p, b3p = prepared
    B = x.shape[0]
    x2d = x.reshape(B, -1)                       # FlattenLayer / input_layer
    assert x2d.shape[1] == NUM_INPUTS
    x2d = x2d.astype(jnp.float32)

    TB = _pick_batch_tile(B, batch_tile)
    grid = (pl.cdiv(B, TB),)

    on_tpu = jax.default_backend() == "tpu"
    p = float(dropout)
    keep = 1.0 - p
    if (not is_train) or p <= 0.0:
        mode = "none"
    elif p >= 1.0:
        mode = "drop_all"
    elif on_tpu:
        mode = "rng"                              # in-kernel PRNG (no HBM masks)
    else:
        mode = "mask"                             # interpret / non-TPU fallback

    kernel = functools.partial(_mlp_kernel, keep=keep, dropout_mode=mode,
                               seed=int(seed))

    in_specs = [
        pl.BlockSpec((TB, NUM_INPUTS), lambda i: (i, 0)),       # x tile (f32)
        pl.BlockSpec((NUM_INPUTS, NUM_H1), lambda i: (0, 0)),   # W1 (resident)
        pl.BlockSpec((1, NUM_H1), lambda i: (0, 0)),            # b1
        pl.BlockSpec((NUM_H1, NUM_H2), lambda i: (0, 0)),       # W2
        pl.BlockSpec((1, NUM_H2), lambda i: (0, 0)),            # b2
        pl.BlockSpec((NUM_H2, N_PAD), lambda i: (0, 0)),        # W3 (padded N)
        pl.BlockSpec((1, N_PAD), lambda i: (0, 0)),             # b3 (padded N)
    ]
    args = [x2d, W1p, b1p, W2p, b2p, W3p, b3p]

    if mode == "mask":
        # TODO(synk): fallback only; masks use jax.random (not torch.rand), so
        # the statistics match but the exact random bitstream differs.
        k1, k2 = jax.random.split(jax.random.PRNGKey(int(seed)))
        m1 = (jax.random.uniform(k1, (B, NUM_H1)) < keep).astype(jnp.uint8)
        m2 = (jax.random.uniform(k2, (B, NUM_H2)) < keep).astype(jnp.uint8)
        in_specs += [pl.BlockSpec((TB, NUM_H1), lambda i: (i, 0)),
                     pl.BlockSpec((TB, NUM_H2), lambda i: (i, 0))]
        args += [m1, m2]

    out = pl.pallas_call(
        kernel,
        grid=grid,
        in_specs=in_specs,
        out_specs=pl.BlockSpec((TB, N_PAD), lambda i: (i, 0)),
        out_shape=jax.ShapeDtypeStruct((B, N_PAD), jnp.float32),
        compiler_params=_compiler_params(1),
    )(*args)
    return out[:, :NUM_OUT]


# ----------------------------------------------------------------------------
# Init + pure-JAX reference
# ----------------------------------------------------------------------------
def init_params(key):
    """N(0, 0.01) weights, zero biases (PyTorch-layout (out, in))."""
    k1, k2, k3 = jax.random.split(key, 3)
    W1 = 0.01 * jax.random.normal(k1, (NUM_H1, NUM_INPUTS), dtype=jnp.float32)
    b1 = jnp.zeros((NUM_H1,), dtype=jnp.float32)
    W2 = 0.01 * jax.random.normal(k2, (NUM_H2, NUM_H1), dtype=jnp.float32)
    b2 = jnp.zeros((NUM_H2,), dtype=jnp.float32)
    W3 = 0.01 * jax.random.normal(k3, (NUM_OUT, NUM_H2), dtype=jnp.float32)
    b3 = jnp.zeros((NUM_OUT,), dtype=jnp.float32)
    return (W1, b1, W2, b2, W3, b3)


def _reference(x, params):
    """Eval-mode reference mirroring the kernel's bf16-in / f32-accum numerics."""
    W1, b1, W2, b2, W3, b3 = params
    bf = lambda a: a.astype(jnp.bfloat16).astype(jnp.float32)
    h = bf(x.reshape(x.shape[0], -1))
    h = jnp.maximum(h @ bf(W1).T + b1, 0.0)
    h = jnp.maximum(bf(h) @ bf(W2).T + b2, 0.0)
    return bf(h) @ bf(W3).T + b3


if __name__ == "__main__":
    key = jax.random.PRNGKey(0)
    pkey, xkey = jax.random.split(key)

    # 1) FlattenLayer (the spec module) on a small NCHW input: single tile.
    xf = jax.random.normal(xkey, (2, 4, 16, 16), dtype=jnp.float32)
    yf = jax.block_until_ready(flatten_layer(xf))
    assert yf.shape == (2, 4 * 16 * 16)
    assert jnp.array_equal(yf, xf.reshape(2, -1))

    # 1b) FlattenLayer with a multi-step grid on both axes (partial trailing
    #     batch block + feature tiling) — exercises the masked-block path.
    xf2 = jax.random.normal(jax.random.fold_in(xkey, 7), (24, 4, 32, 32),
                            dtype=jnp.float32)
    yf2 = jax.block_until_ready(flatten_layer(xf2))
    assert yf2.shape == (24, 4 * 32 * 32)
    assert jnp.array_equal(yf2, xf2.reshape(24, -1))

    # 2) Fused MLP forward, eval mode, single batch tile.
    params = init_params(pkey)
    prepared = prepare_params(params)
    x = jax.random.normal(xkey, (8, 1, 28, 28), dtype=jnp.float32)
    y = jax.block_until_ready(net_forward(x, prepared))
    assert y.shape == (8, NUM_OUT)
    assert jnp.allclose(y, _reference(x, params), atol=5e-4, rtol=5e-3)

    # 3) Multi-step batch grid with a partial trailing block (B=24 -> TB=16).
    xm = jax.random.normal(jax.random.fold_in(xkey, 1), (24, 1, 28, 28),
                           dtype=jnp.float32)
    ym = jax.block_until_ready(net_forward(xm, prepared))
    assert ym.shape == (24, NUM_OUT)
    assert jnp.allclose(ym, _reference(xm, params), atol=5e-4, rtol=5e-3)

    # 4) Train mode with in-kernel PRNG dropout.
    yt = jax.block_until_ready(
        net_forward(x, prepared, dropout=0.5, is_train=True, seed=123))
    assert yt.shape == (8, NUM_OUT)
    assert bool(jnp.all(jnp.isfinite(yt)))

    # 5) Degenerate dropout=1.0 drops all hidden activations -> logits == b3 == 0.
    yz = jax.block_until_ready(
        net_forward(x, prepared, dropout=1.0, is_train=True, seed=123))
    assert jnp.allclose(yz, 0.0, atol=1e-6)

    print("KERNEL_OK")
</pallas_src>

<mosaic_0001>
module attributes {stable_mosaic.version = 11 : i64} {
  func.func @_flatten_copy_kernel(%arg0: i32, %arg1: i32, %arg2: memref<2x1024xf32, #tpu.memory_space<vmem>>, %arg3: memref<2x1024xf32, #tpu.memory_space<vmem>>) attributes {dimension_semantics = [#tpu.dimension_semantics<arbitrary>, #tpu.dimension_semantics<arbitrary>], iteration_bounds = array<i64: 1, 1>, scalar_prefetch = 0 : i64, scratch_operands = 0 : i64, tpu.core_type = #tpu.core_type<tc>, window_params = [{transform_indices = @transform_0, window_bounds = array<i64: 2, 1024>}, {transform_indices = @transform_1, window_bounds = array<i64: 2, 1024>}]} {
    %c0 = arith.constant 0 : index
    %c0_0 = arith.constant 0 : index
    %0 = vector.load %arg2[%c0, %c0_0] : memref<2x1024xf32, #tpu.memory_space<vmem>>, vector<2x1024xf32>
    %c0_1 = arith.constant 0 : index
    %c0_2 = arith.constant 0 : index
    %1 = vector.load %arg3[%c0_1, %c0_2] : memref<2x1024xf32, #tpu.memory_space<vmem>>, vector<2x1024xf32>
    tpu.vector_store %arg3[%c0_1, %c0_2], %0 {strides = array<i32>} : memref<2x1024xf32, #tpu.memory_space<vmem>>, vector<2x1024xf32>,
    return
  }
  func.func @transform_0(%arg0: i32, %arg1: i32) -> (i32, i32) {
    %c0_i32 = arith.constant 0 : i32
    return %arg0, %arg1 : i32, i32
  }
  func.func @transform_1(%arg0: i32, %arg1: i32) -> (i32, i32) {
    %c0_i32 = arith.constant 0 : i32
    return %arg0, %arg1 : i32, i32
  }
}

</mosaic_0001>

<llo_original>
// kernel: tpu_custom_call.1
$region0: #{tpu_custom_call.1}
  #allocation0 [shape = 'u32[]', space=smem, size = 0x4, offset = 0x4, fixed_abs, tag = 'smem constant byte address 0x4 - core index']
  #allocation1 [shape = 'u32[144,128]{1,0:T(1,128)}', space=vmem, size = 0x12000, scoped, tag = 'internal scratch']
  %s0 = inlined_call_operand.hbm [shape: f32[2,1024], index: 0, kind: input, shape index: {}]
  %s1 = inlined_call_operand.hbm [shape: f32[2,1024], index: 1, kind: output, shape index: {}]
  %s2 = sld [smem:[#allocation0]]
  $region18: #{tpu_custom_call.1} parent=0
    _
  %s4 = ssub.s32 1, %s2
  %s5 = scalar_select 0, %s4, %s2
  $region1: #{tpu_custom_call.1} parent=0
    #allocation2 [shape = 'u8[8192]{0}', space=vmem, size = 0x2000, scoped, tag = 'input window, operand 0, single buffered']
    #allocation3 [shape = 's32[1]{0}', space=sflag, size = 0x4, scoped, tag = 'scoped memory for tpu_custom_call.1']
    #allocation4 [shape = 's32[1]{0}', space=sflag, size = 0x4, scoped, tag = 'scoped memory for tpu_custom_call.1']
    #allocation5 [shape = 'u8[8192]{0}', space=vmem, size = 0x2000, scoped, tag = 'output window, operand 0, single buffered']
    %6 = vsyncpa [#allocation3], 0
    %7 = vsyncpa [#allocation4], 0
    // Predicated region
    $region2: #{tpu_custom_call.1} parent=1 // pred_check
      _
    $region3: #{tpu_custom_call.1} parent=1 // pred_check_branch
      %9 = sbr.rel (0) target = $region5
    $region4: #{tpu_custom_call.1} parent=1 // pred_region
      %s11 = ssub.s32 256, 256
      %12 = vsyncadd [#allocation3], %s11
      %s14 = sshll.u32 [#allocation2], 4
      %s15 = int_to_ptr.vmem [resolvable:$true] %s14
      %17 = dma.hbm_to_vmem [thread:$0]  %s0, 256, %s15, [#allocation3]
    $region5: #{tpu_custom_call.1} parent=1 // pred_fallthru
      _
    // Predicated region
    $region6: #{tpu_custom_call.1} parent=1 // pred_check
      _
    $region7: #{tpu_custom_call.1} parent=1 // pred_check_branch
      %19 = sbr.rel (0) target = $region9
    $region8: #{tpu_custom_call.1} parent=1 // pred_region
      %20 = dma.done [#allocation3], 256
    $region9: #{tpu_custom_call.1} parent=1 // pred_fallthru
      _
    %v21 = vld [vmem:[#allocation2] sm:$0xff]
    %v22 = vld [vmem:[#allocation2 + $0x8] sm:$0xff]
    %23 = vst [vmem:[#allocation5] sm:$0xff] %v21
    %24 = vst [vmem:[#allocation5 + $0x8] sm:$0xff] %v22
    // Predicated region
    $region10: #{tpu_custom_call.1} parent=1 // pred_check
      _
    $region11: #{tpu_custom_call.1} parent=1 // pred_check_branch
      %26 = sbr.rel (0) target = $region13
    $region12: #{tpu_custom_call.1} parent=1 // pred_region
      %s28 = ssub.s32 256, 256
      %29 = vsyncadd [#allocation4], %s28
      %s31 = sshll.u32 [#allocation5], 4
      %s32 = int_to_ptr.vmem [resolvable:$true] %s31
      %34 = dma.vmem_to_hbm [thread:$0]  %s32, 256, %s1, [#allocation4]
    $region13: #{tpu_custom_call.1} parent=1 // pred_fallthru
      _
    // Predicated region
    $region14: #{tpu_custom_call.1} parent=1 // pred_check
      _
    $region15: #{tpu_custom_call.1} parent=1 // pred_check_branch
      %36 = sbr.rel (0) target = $region17
    $region16: #{tpu_custom_call.1} parent=1 // pred_region
      %37 = dma.done [#allocation4], 256
    $region17: #{tpu_custom_call.1} parent=1 // pred_fallthru
      _
    %38 = vsyncpa [#allocation3], 1
    %39 = vsyncpa [#allocation4], 1

</llo_original>
